<compile_context>
chip_gen: v5e
topology: v5e:2x2
jax: 0.10.0
libtpu: 0.0.40
codegen_flags: <defaults>
</compile_context>

<pallas_src>
import math

import jax
import jax.numpy as jnp
from jax.experimental import pallas as pl
from jax.experimental.pallas import tpu as pltpu


def _round_up(x, m):
    return (x + m - 1) // m * m


def _gelu_exact(x):
    # torch.nn.GELU default (erf form).
    return 0.5 * x * (1.0 + jax.lax.erf(x * (1.0 / math.sqrt(2.0))))


def _mlp_kernel(x_ref, w1_ref, b1_ref, w2_ref, b2_ref, o_ref):
    # fc1: (TM, K) @ (K, Hp) -> (TM, Hp), f32 accumulation on the MXU.
    h = jnp.dot(x_ref[...], w1_ref[...], preferred_element_type=jnp.float32)
    h = _gelu_exact(h + b1_ref[...])
    # TODO(synk): dropout omitted (module uses p=0.0 / inference); for p>0 add
    # pltpu.prng_seed + pltpu.stateful_bernoulli masking here.
    # fc2: (TM, Hp) @ (Hp, Np) -> (TM, Np)
    out = jnp.dot(h.astype(w2_ref.dtype), w2_ref[...],
                  preferred_element_type=jnp.float32)
    o_ref[...] = (out + b2_ref[...]).astype(o_ref.dtype)


def mlp_forward(x, w1, b1, w2, b2, *, block_m=None, vmem_limit_bytes=64 << 20):
    """Fused MLP forward.

    x  : (..., in_features)
    w1 : (hidden_features, in_features)   -- PyTorch nn.Linear layout
    b1 : (hidden_features,)
    w2 : (out_features, hidden_features)
    b2 : (out_features,)
    returns (..., out_features)
    """
    lead_shape = x.shape[:-1]
    D_in = x.shape[-1]
    H = w1.shape[0]
    D_out = w2.shape[0]
    M = int(math.prod(lead_shape)) if lead_shape else 1

    # Pad hidden / output feature dims to lane-dense multiples of 128.
    Hp = _round_up(H, 128)
    Np = _round_up(D_out, 128)

    # One-time weight layout prep (weights are static; this is outside the hot loop).
    w1m = jnp.pad(w1.T, ((0, 0), (0, Hp - H)))                     # (D_in, Hp)
    b1m = jnp.pad(b1, (0, Hp - H)).reshape(1, Hp)
    w2m = jnp.pad(w2.T, ((0, Hp - H), (0, Np - D_out)))            # (Hp, Np)
    b2m = jnp.pad(b2, (0, Np - D_out)).reshape(1, Np)

    # Pick the row-tile size; shrink until per-step VMEM footprint fits a
    # conservative budget (safe on v7x's 32 MiB scoped VMEM default).
    if block_m is None:
        block_m = 512
    TM = _round_up(max(8, min(block_m, max(M, 8))), 8)
    budget = 24 * 1024 * 1024

    def _footprint(tm):
        io = 2 * 4 * tm * (D_in + Np)                  # double-buffered x / out tiles
        w = 2 * 4 * (D_in * Hp + Hp * Np + Hp + Np)    # resident weights (+headroom)
        hid = 4 * tm * Hp                              # in-kernel hidden activation
        return io + w + hid

    while TM > 8 and _footprint(TM) > budget:
        TM = max(8, TM // 2)

    Mp = _round_up(M, TM)
    xm = x.reshape(M, D_in)
    xp = jnp.pad(xm, ((0, Mp - M), (0, 0)))

    flops = 2 * M * D_in * H + 2 * M * H * D_out
    bytes_accessed = (
        x.dtype.itemsize * (M * D_in + M * D_out)
        + 4 * (D_in * H + H + H * D_out + D_out)
    )
    cost = pl.CostEstimate(
        flops=flops, transcendentals=M * H, bytes_accessed=int(bytes_accessed)
    )

    out = pl.pallas_call(
        _mlp_kernel,
        out_shape=jax.ShapeDtypeStruct((Mp, Np), x.dtype),
        grid=(Mp // TM,),
        in_specs=[
            pl.BlockSpec((TM, D_in), lambda i: (i, 0)),   # x row-tile
            pl.BlockSpec((D_in, Hp), lambda i: (0, 0)),   # w1 (resident)
            pl.BlockSpec((1, Hp), lambda i: (0, 0)),      # b1
            pl.BlockSpec((Hp, Np), lambda i: (0, 0)),     # w2 (resident)
            pl.BlockSpec((1, Np), lambda i: (0, 0)),      # b2
        ],
        out_specs=pl.BlockSpec((TM, Np), lambda i: (i, 0)),
        compiler_params=pltpu.CompilerParams(
            dimension_semantics=("parallel",),
            vmem_limit_bytes=vmem_limit_bytes,
        ),
        cost_estimate=cost,
    )(xp, w1m, b1m, w2m, b2m)

    return out[:M, :D_out].reshape(*lead_shape, D_out)


if __name__ == "__main__":
    # Small shapes consistent with the module: batch=2, seq=8, in_features=32,
    # hidden_features=64, out_features=32 (defaults: out=in).
    B, S, D_in, H = 2, 8, 32, 64
    D_out = D_in

    key = jax.random.PRNGKey(0)
    kx, k1, kb1, k2, kb2 = jax.random.split(key, 5)
    x = jax.random.normal(kx, (B, S, D_in), dtype=jnp.float32)
    w1 = jax.random.normal(k1, (H, D_in), dtype=jnp.float32) * 0.05
    b1 = jax.random.normal(kb1, (H,), dtype=jnp.float32) * 0.05
    w2 = jax.random.normal(k2, (D_out, H), dtype=jnp.float32) * 0.05
    b2 = jax.random.normal(kb2, (D_out,), dtype=jnp.float32) * 0.05

    # block_m=8 so the tiny demo still exercises a multi-step (pipelined) grid.
    out = mlp_forward(x, w1, b1, w2, b2, block_m=8)
    out = jax.block_until_ready(out)

    # Plain-JAX reference of the PyTorch forward:
    #   y = gelu(x @ W1^T + b1) @ W2^T + b2   (dropout p=0.0 is identity)
    h_ref = _gelu_exact(jnp.einsum("bsd,hd->bsh", x, w1) + b1)
    ref = jnp.einsum("bsh,oh->bso", h_ref, w2) + b2

    assert out.shape == (B, S, D_out)
    assert jnp.allclose(out, ref, atol=1e-4, rtol=1e-4), float(
        jnp.max(jnp.abs(out - ref))
    )

    print("KERNEL_OK")
</pallas_src>

<mosaic_0001>
module attributes {stable_mosaic.version = 11 : i64} {
  func.func @_mlp_kernel(%arg0: i32, %arg1: memref<8x32xf32, #tpu.memory_space<vmem>>, %arg2: memref<32x128xf32, #tpu.memory_space<vmem>>, %arg3: memref<1x128xf32, #tpu.memory_space<vmem>>, %arg4: memref<128x128xf32, #tpu.memory_space<vmem>>, %arg5: memref<1x128xf32, #tpu.memory_space<vmem>>, %arg6: memref<8x128xf32, #tpu.memory_space<vmem>>) attributes {dimension_semantics = [#tpu.dimension_semantics<parallel>], iteration_bounds = array<i64: 2>, scalar_prefetch = 0 : i64, scratch_operands = 0 : i64, tpu.core_type = #tpu.core_type<tc>, window_params = [{transform_indices = @transform_0, window_bounds = array<i64: 8, 32>}, {pipeline_mode = #tpu.pipeline_mode<synchronous>, transform_indices = @transform_1, window_bounds = array<i64: 32, 128>}, {pipeline_mode = #tpu.pipeline_mode<synchronous>, transform_indices = @transform_2, window_bounds = array<i64: 1, 128>}, {pipeline_mode = #tpu.pipeline_mode<synchronous>, transform_indices = @transform_3, window_bounds = array<i64: 128, 128>}, {pipeline_mode = #tpu.pipeline_mode<synchronous>, transform_indices = @transform_4, window_bounds = array<i64: 1, 128>}, {transform_indices = @transform_5, window_bounds = array<i64: 8, 128>}]} {
    %c0 = arith.constant 0 : index
    %c0_0 = arith.constant 0 : index
    %0 = vector.load %arg1[%c0, %c0_0] : memref<8x32xf32, #tpu.memory_space<vmem>>, vector<8x32xf32>
    %c0_1 = arith.constant 0 : index
    %c0_2 = arith.constant 0 : index
    %1 = vector.load %arg2[%c0_1, %c0_2] : memref<32x128xf32, #tpu.memory_space<vmem>>, vector<32x128xf32>
    %cst = arith.constant dense<0.000000e+00> : vector<8x128xf32>
    %2 = tpu.matmul %0, %1, %cst {dimension_numbers = #tpu.dot_dimension_numbers<[1], [0], [0], [1], [0, 0, 1, 1], [], []>} : vector<8x32xf32>, vector<32x128xf32>, vector<8x128xf32> -> vector<8x128xf32>
    %c0_3 = arith.constant 0 : index
    %c0_4 = arith.constant 0 : index
    %3 = vector.load %arg3[%c0_3, %c0_4] : memref<1x128xf32, #tpu.memory_space<vmem>>, vector<1x128xf32>
    %4 = vector.broadcast %3 : vector<1x128xf32> to vector<8x128xf32>
    %5 = arith.addf %2, %4 : vector<8x128xf32>
    %cst_5 = arith.constant 5.000000e-01 : f32
    %6 = vector.broadcast %cst_5 : f32 to vector<8x128xf32>
    %7 = arith.mulf %6, %5 : vector<8x128xf32>
    %cst_6 = arith.constant 0.707106769 : f32
    %8 = vector.broadcast %cst_6 : f32 to vector<8x128xf32>
    %9 = arith.mulf %5, %8 : vector<8x128xf32>
    %10 = math.erf %9 : vector<8x128xf32>
    %cst_7 = arith.constant 1.000000e+00 : f32
    %11 = vector.broadcast %cst_7 : f32 to vector<8x128xf32>
    %12 = arith.addf %11, %10 : vector<8x128xf32>
    %13 = arith.mulf %7, %12 : vector<8x128xf32>
    %c0_8 = arith.constant 0 : index
    %c0_9 = arith.constant 0 : index
    %14 = vector.load %arg4[%c0_8, %c0_9] : memref<128x128xf32, #tpu.memory_space<vmem>>, vector<128x128xf32>
    %cst_10 = arith.constant dense<0.000000e+00> : vector<8x128xf32>
    %15 = tpu.matmul %13, %14, %cst_10 {dimension_numbers = #tpu.dot_dimension_numbers<[1], [0], [0], [1], [0, 0, 1, 1], [], []>} : vector<8x128xf32>, vector<128x128xf32>, vector<8x128xf32> -> vector<8x128xf32>
    %c0_11 = arith.constant 0 : index
    %c0_12 = arith.constant 0 : index
    %16 = vector.load %arg5[%c0_11, %c0_12] : memref<1x128xf32, #tpu.memory_space<vmem>>, vector<1x128xf32>
    %17 = vector.broadcast %16 : vector<1x128xf32> to vector<8x128xf32>
    %18 = arith.addf %15, %17 : vector<8x128xf32>
    %c0_13 = arith.constant 0 : index
    %c0_14 = arith.constant 0 : index
    %19 = vector.load %arg6[%c0_13, %c0_14] : memref<8x128xf32, #tpu.memory_space<vmem>>, vector<8x128xf32>
    tpu.vector_store %arg6[%c0_13, %c0_14], %18 {strides = array<i32>} : memref<8x128xf32, #tpu.memory_space<vmem>>, vector<8x128xf32>,
    return
  }
  func.func @transform_0(%arg0: i32) -> (i32, i32) {
    %c0_i32 = arith.constant 0 : i32
    %c0_i32_0 = arith.constant 0 : i32
    return %arg0, %c0_i32 : i32, i32
  }
  func.func @transform_1(%arg0: i32) -> (i32, i32) {
    %c0_i32 = arith.constant 0 : i32
    %c0_i32_0 = arith.constant 0 : i32
    %c0_i32_1 = arith.constant 0 : i32
    return %c0_i32, %c0_i32_0 : i32, i32
  }
  func.func @transform_2(%arg0: i32) -> (i32, i32) {
    %c0_i32 = arith.constant 0 : i32
    %c0_i32_0 = arith.constant 0 : i32
    %c0_i32_1 = arith.constant 0 : i32
    return %c0_i32, %c0_i32_0 : i32, i32
  }
  func.func @transform_3(%arg0: i32) -> (i32, i32) {
    %c0_i32 = arith.constant 0 : i32
    %c0_i32_0 = arith.constant 0 : i32
    %c0_i32_1 = arith.constant 0 : i32
    return %c0_i32, %c0_i32_0 : i32, i32
  }
  func.func @transform_4(%arg0: i32) -> (i32, i32) {
    %c0_i32 = arith.constant 0 : i32
    %c0_i32_0 = arith.constant 0 : i32
    %c0_i32_1 = arith.constant 0 : i32
    return %c0_i32, %c0_i32_0 : i32, i32
  }
  func.func @transform_5(%arg0: i32) -> (i32, i32) {
    %c0_i32 = arith.constant 0 : i32
    %c0_i32_0 = arith.constant 0 : i32
    return %arg0, %c0_i32 : i32, i32
  }
}

</mosaic_0001>

<llo_original>
// kernel: tpu_custom_call.1
$region0: #{tpu_custom_call.1}
  #allocation0 [shape = 'u32[]', space=smem, size = 0x4, offset = 0x4, fixed_abs, tag = 'smem constant byte address 0x4 - core index']
  #allocation1 [shape = 'u32[72,128]{1,0:T(1,128)}', space=vmem, size = 0x9000, scoped, tag = 'internal scratch']
  %s0 = inlined_call_operand.hbm [shape: f32[16,32], index: 0, kind: input, shape index: {}]
  %s1 = inlined_call_operand.hbm [shape: f32[32,128], index: 1, kind: input, shape index: {}]
  %s2 = inlined_call_operand.vmem [shape: f32[1,128], index: 2, kind: input, shape index: {}]
  %s3 = inlined_call_operand.hbm [shape: f32[128,128], index: 3, kind: input, shape index: {}]
  %s4 = inlined_call_operand.vmem [shape: f32[1,128], index: 4, kind: input, shape index: {}]
  %s5 = inlined_call_operand.hbm [shape: f32[16,128], index: 5, kind: output, shape index: {}]
  %s6 = sld [smem:[#allocation0]]
  $region65: #{tpu_custom_call.1} parent=0
    _
  %s8 = ssub.s32 1, %s6
  %s9 = scalar_select 0, %s8, %s6
  $region1: #{tpu_custom_call.1} parent=0
    #allocation2 [shape = 'u8[8192]{0}', space=vmem, size = 0x2000, scoped, tag = 'input window, operand 0']
    #allocation3 [shape = 's32[2]{0}', space=sflag, size = 0x8, scoped, tag = 'scoped memory for tpu_custom_call.1']
    #allocation4 [shape = 's32[2]{0}', space=sflag, size = 0x8, scoped, tag = 'scoped memory for tpu_custom_call.1']
    #allocation5 [shape = 'u8[16384]{0}', space=vmem, size = 0x4000, scoped, tag = 'input window, operand 1, single buffered']
    #allocation6 [shape = 's32[1]{0}', space=sflag, size = 0x4, scoped, tag = 'scoped memory for tpu_custom_call.1']
    #allocation7 [shape = 'u8[65536]{0}', space=vmem, size = 0x10000, scoped, tag = 'input window, operand 3, single buffered']
    #allocation8 [shape = 'u8[8192]{0}', space=vmem, size = 0x2000, scoped, tag = 'output window, operand 0']
    %10 = vsyncpa [#allocation3], 0
    %s11 = scalar_lea.sflag [#allocation3], 1
    %12 = vsyncpa %s11, 0
    %13 = vsyncpa [#allocation6], 0
    %14 = vsyncpa [#allocation4], 0
    %s15 = scalar_lea.sflag [#allocation4], 1
    %16 = vsyncpa %s15, 0
    loop: start=0, step=1, limit=4
    $region2: #{tpu_custom_call.1} parent=1 // loop_pre_header
      _
    $region3: #{tpu_custom_call.1} parent=1 // loop_header
      %s18 = sphi 0, %s22
      %p19 = scmp.ge.s32.totalorder %s18, 4
      %s28 = sphi 0, %s30
      %s31 = sphi 0, %s28
      %s32 = sphi 0, %s31
      %s48 = sphi 0, %s32
      %s52 = sphi 0, %s52
      %s54 = sphi 0, %s52
      %s55 = sphi 0, %s54
      %s69 = sphi 0, %s55
      %s73 = sphi 0, %s73
      %s75 = sphi 0, %s73
      %s76 = sphi 0, %s75
      %s90 = sphi 0, %s76
      %s94 = sphi 0, %s94
      %s96 = sphi 0, %s94
      %s97 = sphi 0, %s96
      %s111 = sphi 0, %s97
      %s115 = sphi 0, %s115
      %s117 = sphi 0, %s115
      %s118 = sphi 0, %s117
      %s132 = sphi 0, %s118
      %s138 = sphi 0, %s140
      %s141 = sphi 0, %s138
      %s142 = sphi 0, %s141
      %s158 = sphi 0, %s142
    $region4: #{tpu_custom_call.1} parent=1 // loop_header_branch
      %21 = sbr.rel (%p19) target = $region8
    $region5: #{tpu_custom_call.1} parent=1 // loop_body
      %s23 = ssub.s32 %s18, 1
      %s24 = ssub.s32 %s18, 2
      %s25 = sadd.s32 %s18, 1
      %s26 = ssub.s32 %s18, %s25
      %p27 = scmp.eq.s32.totalorder %s26, 0
      %s29 = sadd.s32 %s28, 1
      %s30 = scalar_select %p27, %s28, %s29
      %p33 = pneg %p27
      %p34 = scmp.eq.s32.totalorder %s18, 1
      %p35 = por %p33, %p34
      %p36 = scmp.ne.s32.totalorder %s28, %s31
      %p37 = scmp.eq.s32.totalorder %s18, 0
      %p38 = por %p36, %p37
      %p39 = scmp.ne.s32.totalorder %s28, %s31
      %p40 = scmp.eq.s32.totalorder %s23, 1
      %p41 = por %p39, %p40
      %p42 = scmp.ne.s32.totalorder %s31, %s32
      %p43 = scmp.eq.s32.totalorder %s23, 0
      %p44 = por %p42, %p43
      %p45 = scmp.ne.s32.totalorder %s31, %s32
      %p46 = scmp.eq.s32.totalorder %s24, 1
      %p47 = por %p45, %p46
      %p49 = scmp.ne.s32.totalorder %s32, %s48
      %p50 = scmp.eq.s32.totalorder %s24, 0
      %p51 = por %p49, %p50
      %s53 = sadd.s32 %s52, 1
      %p56 = scmp.eq.s32.totalorder %s18, 1
      %p57 = scmp.ne.s32.totalorder %s52, %s54
      %p58 = scmp.eq.s32.totalorder %s18, 0
      %p59 = por %p57, %p58
      %p60 = scmp.ne.s32.totalorder %s52, %s54
      %p61 = scmp.eq.s32.totalorder %s23, 1
      %p62 = por %p60, %p61
      %p63 = scmp.ne.s32.totalorder %s54, %s55
      %p64 = scmp.eq.s32.totalorder %s23, 0
      %p65 = por %p63, %p64
      %p66 = scmp.ne.s32.totalorder %s54, %s55
      %p67 = scmp.eq.s32.totalorder %s24, 1
      %p68 = por %p66, %p67
      %p70 = scmp.ne.s32.totalorder %s55, %s69
      %p71 = scmp.eq.s32.totalorder %s24, 0
      %p72 = por %p70, %p71
      %s74 = sadd.s32 %s73, 1
      %p77 = scmp.eq.s32.totalorder %s18, 1
      %p78 = scmp.ne.s32.totalorder %s73, %s75
      %p79 = scmp.eq.s32.totalorder %s18, 0
      %p80 = por %p78, %p79
      %p81 = scmp.ne.s32.totalorder %s73, %s75
      %p82 = scmp.eq.s32.totalorder %s23, 1
      %p83 = por %p81, %p82
      %p84 = scmp.ne.s32.totalorder %s75, %s76
      %p85 = scmp.eq.s32.totalorder %s23, 0
      %p86 = por %p84, %p85
      %p87 = scmp.ne.s32.totalorder %s75, %s76
      %p88 = scmp.eq.s32.totalorder %s24, 1
      %p89 = por %p87, %p88
      %p91 = scmp.ne.s32.totalorder %s76, %s90
      %p92 = scmp.eq.s32.totalorder %s24, 0
      %p93 = por %p91, %p92
      %s95 = sadd.s32 %s94, 1
      %p98 = scmp.eq.s32.totalorder %s18, 1
      %p99 = scmp.ne.s32.totalorder %s94, %s96
      %p100 = scmp.eq.s32.totalorder %s18, 0
      %p101 = por %p99, %p100
      %p102 = scmp.ne.s32.totalorder %s94, %s96
      %p103 = scmp.eq.s32.totalorder %s23, 1
      %p104 = por %p102, %p103
      %p105 = scmp.ne.s32.totalorder %s96, %s97
      %p106 = scmp.eq.s32.totalorder %s23, 0
      %p107 = por %p105, %p106
      %p108 = scmp.ne.s32.totalorder %s96, %s97
      %p109 = scmp.eq.s32.totalorder %s24, 1
      %p110 = por %p108, %p109
      %p112 = scmp.ne.s32.totalorder %s97, %s111
      %p113 = scmp.eq.s32.totalorder %s24, 0
      %p114 = por %p112, %p113
      %s116 = sadd.s32 %s115, 1
      %p119 = scmp.eq.s32.totalorder %s18, 1
      %p120 = scmp.ne.s32.totalorder %s115, %s117
      %p121 = scmp.eq.s32.totalorder %s18, 0
      %p122 = por %p120, %p121
      %p123 = scmp.ne.s32.totalorder %s115, %s117
      %p124 = scmp.eq.s32.totalorder %s23, 1
      %p125 = por %p123, %p124
      %p126 = scmp.ne.s32.totalorder %s117, %s118
      %p127 = scmp.eq.s32.totalorder %s23, 0
      %p128 = por %p126, %p127
      %p129 = scmp.ne.s32.totalorder %s117, %s118
      %p130 = scmp.eq.s32.totalorder %s24, 1
      %p131 = por %p129, %p130
      %p133 = scmp.ne.s32.totalorder %s118, %s132
      %p134 = scmp.eq.s32.totalorder %s24, 0
      %p135 = por %p133, %p134
      %s136 = ssub.s32 %s18, %s25
      %p137 = scmp.eq.s32.totalorder %s136, 0
      %s139 = sadd.s32 %s138, 1
      %s140 = scalar_select %p137, %s138, %s139
      %p143 = pneg %p137
      %p144 = scmp.eq.s32.totalorder %s18, 1
      %p145 = por %p143, %p144
      %p146 = scmp.ne.s32.totalorder %s138, %s141
      %p147 = scmp.eq.s32.totalorder %s18, 0
      %p148 = por %p146, %p147
      %p149 = scmp.ne.s32.totalorder %s138, %s141
      %p150 = scmp.eq.s32.totalorder %s23, 1
      %p151 = por %p149, %p150
      %p152 = scmp.ne.s32.totalorder %s141, %s142
      %p153 = scmp.eq.s32.totalorder %s23, 0
      %p154 = por %p152, %p153
      %p155 = scmp.ne.s32.totalorder %s141, %s142
      %p156 = scmp.eq.s32.totalorder %s24, 1
      %p157 = por %p155, %p156
      %p159 = scmp.ne.s32.totalorder %s142, %s158
      %p160 = scmp.eq.s32.totalorder %s24, 0
      %p161 = por %p159, %p160
      %p162 = scmp.le.s32.totalorder 1, %s18
      %p163 = scmp.lt.s32.totalorder %s18, 3
      %p164 = pnand %p162, %p163
      %p165 = pneg %p164
      // Predicated region
      $region9: #{tpu_custom_call.1} parent=5 // pred_check
        _
      $region10: #{tpu_custom_call.1} parent=5 // pred_check_branch
        %167 = sbr.rel (%p164) target = $region12
      $region11: #{tpu_custom_call.1} parent=5 // pred_region
        %s168 = ssub.s32 %s18, 1
        // Predicated region
        $region13: #{tpu_custom_call.1} parent=11 // pred_check
          %p169 = pneg %p65
        $region14: #{tpu_custom_call.1} parent=11 // pred_check_branch
          %171 = sbr.rel (%p169) target = $region16
        $region15: #{tpu_custom_call.1} parent=11 // pred_region
          %173 = vsyncadd [#allocation6], 0
          %s174 = sshll.u32 %s1, 4
          %s175 = int_to_ptr.hbm [resolvable:$true] %s174
          %s176 = sshll.u32 [#allocation5], 4
          %s177 = int_to_ptr.vmem [resolvable:$true] %s176
          %182 = dma.hbm_to_vmem [thread:$0]  %s175, 512, %s177, [#allocation6], 128, 128, 8
        $region16: #{tpu_custom_call.1} parent=11 // pred_fallthru
          _
        // Predicated region
        $region17: #{tpu_custom_call.1} parent=11 // pred_check
          %p183 = pneg %p86
        $region18: #{tpu_custom_call.1} parent=11 // pred_check_branch
          %185 = sbr.rel (%p183) target = $region20
        $region19: #{tpu_custom_call.1} parent=11 // pred_region
          _
        $region20: #{tpu_custom_call.1} parent=11 // pred_fallthru
          _
        // Predicated region
        $region21: #{tpu_custom_call.1} parent=11 // pred_check
          %p186 = pneg %p107
        $region22: #{tpu_custom_call.1} parent=11 // pred_check_branch
          %188 = sbr.rel (%p186) target = $region24
        $region23: #{tpu_custom_call.1} parent=11 // pred_region
          %190 = vsyncadd [#allocation6], 0
          %s191 = sshll.u32 %s3, 4
          %s192 = int_to_ptr.hbm [resolvable:$true] %s191
          %s193 = sshll.u32 [#allocation7], 4
          %s194 = int_to_ptr.vmem [resolvable:$true] %s193
          %199 = dma.hbm_to_vmem [thread:$0]  %s192, 2048, %s194, [#allocation6], 128, 128, 8
        $region24: #{tpu_custom_call.1} parent=11 // pred_fallthru
          _
        // Predicated region
        $region25: #{tpu_custom_call.1} parent=11 // pred_check
          %p200 = pneg %p128
        $region26: #{tpu_custom_call.1} parent=11 // pred_check_branch
          %202 = sbr.rel (%p200) target = $region28
        $region27: #{tpu_custom_call.1} parent=11 // pred_region
          _
        $region28: #{tpu_custom_call.1} parent=11 // pred_fallthru
          _
      $region12: #{tpu_custom_call.1} parent=5 // pred_fallthru
        _
      %p203 = scmp.lt.s32.totalorder %s18, 2
      // Predicated region
      $region29: #{tpu_custom_call.1} parent=5 // pred_check
        %p204 = pneg %p203
      $region30: #{tpu_custom_call.1} parent=5 // pred_check_branch
        %206 = sbr.rel (%p204) target = $region32
      $region31: #{tpu_custom_call.1} parent=5 // pred_region
        // Predicated region
        $region33: #{tpu_custom_call.1} parent=31 // pred_check
          %p207 = pneg %p38
        $region34: #{tpu_custom_call.1} parent=31 // pred_check_branch
          %209 = sbr.rel (%p207) target = $region36
        $region35: #{tpu_custom_call.1} parent=31 // pred_region
          %s210 = sand.u32 %s28, 1
          %s211 = scalar_lea.sflag [#allocation3], %s210
          %s212 = sand.u32 %s28, 1
          %s213 = smul.addr %s212, 8
          %s214 = scalar_lea.vmem [#allocation2], %s213
          %216 = vsyncadd %s211, 0
          %s217 = smul.addr %s18, 8
          %s218 = scalar_lea.hbm %s0, %s217
          %s220 = sshll.u32 %s218, 4
          %s221 = int_to_ptr.hbm [resolvable:$true] %s220
          %s222 = sshll.u32 %s214, 4
          %s223 = int_to_ptr.vmem [resolvable:$true] %s222
          %225 = dma.hbm_to_vmem [thread:$0]  %s221, 128, %s223, %s211
        $region36: #{tpu_custom_call.1} parent=31 // pred_fallthru
          _
      $region32: #{tpu_custom_call.1} parent=5 // pred_fallthru
        _
      %p226 = scmp.le.s32.totalorder 1, %s18
      %p227 = scmp.lt.s32.totalorder %s18, 3
      %p228 = pnand %p226, %p227
      %p229 = pneg %p228
      // Predicated region
      $region37: #{tpu_custom_call.1} parent=5 // pred_check
        _
      $region38: #{tpu_custom_call.1} parent=5 // pred_check_branch
        %231 = sbr.rel (%p228) target = $region40
      $region39: #{tpu_custom_call.1} parent=5 // pred_region
        %s232 = ssub.s32 %s18, 1
        %s233 = sand.u32 %s31, 1
        %s234 = scalar_lea.sflag [#allocation3], %s233
        %s235 = sand.u32 %s31, 1
        %s236 = smul.addr %s235, 8
        %s237 = scalar_lea.vmem [#allocation2], %s236
        // Predicated region
        $region41: #{tpu_custom_call.1} parent=39 // pred_check
          %p238 = pneg %p44
        $region42: #{tpu_custom_call.1} parent=39 // pred_check_branch
          %240 = sbr.rel (%p238) target = $region44
        $region43: #{tpu_custom_call.1} parent=39 // pred_region
          %242 = dma.done %s234, 128
        $region44: #{tpu_custom_call.1} parent=39 // pred_fallthru
          _
        // Predicated region
        $region45: #{tpu_custom_call.1} parent=39 // pred_check
          %p243 = pneg %p65
        $region46: #{tpu_custom_call.1} parent=39 // pred_check_branch
          %245 = sbr.rel (%p243) target = $region48
        $region47: #{tpu_custom_call.1} parent=39 // pred_region
          %247 = dma.done [#allocation6], 512
        $region48: #{tpu_custom_call.1} parent=39 // pred_fallthru
          _
        // Predicated region
        $region49: #{tpu_custom_call.1} parent=39 // pred_check
          %p248 = pneg %p107
        $region50: #{tpu_custom_call.1} parent=39 // pred_check_branch
          %250 = sbr.rel (%p248) target = $region52
        $region51: #{tpu_custom_call.1} parent=39 // pred_region
          %252 = dma.done [#allocation6], 2048
        $region52: #{tpu_custom_call.1} parent=39 // pred_fallthru
          _
        %s253 = sand.u32 %s31, 1
        %s254 = scalar_lea.sflag [#allocation3], %s253
        %s255 = sand.u32 %s31, 1
        %s256 = smul.addr %s255, 8
        %s257 = scalar_lea.vmem [#allocation2], %s256
        %p258 = pneg %p44
        %p259 = pneg %p41
        %p260 = pneg %p65
        %p261 = pneg %p62
        %p262 = pneg %p86
        %p263 = pneg %p83
        %p264 = pneg %p107
        %p265 = pneg %p104
        %p266 = pneg %p128
        %p267 = pneg %p125
        %p268 = pneg %p154
        %p269 = pneg %p151
        %s270 = sand.u32 %s141, 1
        %s271 = scalar_lea.sflag [#allocation4], %s270
        %s272 = sand.u32 %s141, 1
        %s273 = smul.addr %s272, 8
        %s274 = scalar_lea.vmem [#allocation8], %s273
        %v275 = vld [vmem:[%s237] sm:$0xff]
        %v276 = vld [vmem:[#allocation5] sm:$0xff]
        %v277 = vld [vmem:[#allocation5 + $0x8] sm:$0xff]
        %v278 = vld [vmem:[#allocation5 + $0x10] sm:$0xff]
        %v279 = vld [vmem:[#allocation5 + $0x18] sm:$0xff]
        %v280 = vld [vmem:[%s2] sm:$0x1]
        %v282 = vperm.slane %v280, 0
        %vm284 = vcmask 261120
        %v286 = vsel %vm284, %v275, 0
        %288 = vmatpush.msra.mxu0 0.0
        %289 = vmatpush.msra.mxu0 0.0
        %290 = vmatpush.msra.mxu0 0.0
        %291 = vmatpush.msra.mxu0 0.0
        %292 = vmatpush.msra.mxu0 0.0
        %293 = vmatpush.msra.mxu0 0.0
        %294 = vmatpush.msra.mxu0 0.0
        %295 = vmatpush.msra.mxu0 0.0
        %296 = vmatpush.msra.mxu0 0.0
        %297 = vmatpush.msra.mxu0 0.0
        %298 = vmatpush.msra.mxu0 0.0
        %299 = vmatpush.msra.mxu0 0.0
        %300 = vmatpush.msra.mxu0 %v279
        %301 = vmatpush.msra.mxu0 %v278
        %302 = vmatpush.msra.mxu0 %v277
        %303 = vmatpush.msra.mxu0 %v276
        %304 = vmatmul.f32.gmra.mxu0 %v286
        %v305 = vpop.f32.mrf.mxu0
        %v306 = vadd.f32 %v282, %v305
        %307 = vdwg.mxu0
        %v308 = vmul.f32 %v306, 0.5
        %v309 = vmul.f32 %v306, 0.70710677
        %v310 = vmul.f32 %v309, %v309
        %v311 = vmin.f32 16.0, %v310
        %v312 = vmul.f32 %v311, 2.1237322e-06
        %v313 = vadd.f32 %v312, 0.00028619796
        %v314 = vmul.f32 %v311, %v313
        %v315 = vadd.f32 %v314, 0.0036580483
        %v316 = vmul.f32 %v311, %v315
        %v317 = vadd.f32 %v316, 0.05243302
        %v318 = vmul.f32 %v311, %v317
        %v319 = vadd.f32 %v318, 0.18741608
        %v320 = vmul.f32 %v311, %v319
        %v321 = vadd.f32 %v320, 1.1283791
        %v322 = vmul.f32 %v309, %v321
        %v323 = vmul.f32 %v311, 3.8918573e-05
        %v324 = vadd.f32 %v323, 0.001143296
        %v325 = vmul.f32 %v311, %v324
        %v326 = vadd.f32 %v325, 0.014752088
        %v327 = vmul.f32 %v311, %v326
        %v328 = vadd.f32 %v327, 0.112945676
        %v329 = vmul.f32 %v311, %v328
        %v330 = vadd.f32 %v329, 0.4994258
        %v331 = vmul.f32 %v311, %v330
        %v332 = vadd.f32 %v331, 1.0
        %v333 = vrcp.pop %v332
        %v334 = vmul.f32 %v332, %v333
        %v335 = vsub.f32 1.0, %v334
        %v336 = vmul.f32 %v333, %v335
        %v337 = vadd.f32 %v333, %v336
        %vm338 = vweird.f32 %v332
        %vm339 = vweird.f32 %v333
        %vm340 = vmor %vm338, %vm339
        %v341 = vsel %vm340, %v333, %v337
        %v342 = vand.u32 2147483647, %v332
        %vm343 = vcmp.eq.f32.partialorder %v342, 8.507059e+37
        %v344 = vand.u32 %v332, 2147483648
        %v345 = vor.u32 1.1754944e-38, %v344
        %v346 = vsel %vm343, %v345, %v341
        %v347 = vmul.f32 %v322, %v346
        %v348 = vmin.f32 %v347, 1.0
        %v349 = vmax.f32 %v348, -1.0
        %v350 = vadd.f32 %v349, 1.0
        %v351 = vmul.f32 %v308, %v350
        %v352 = vld [vmem:[#allocation7] sm:$0xff]
        %v353 = vld [vmem:[#allocation7 + $0x8] sm:$0xff]
        %v354 = vld [vmem:[#allocation7 + $0x10] sm:$0xff]
        %v355 = vld [vmem:[#allocation7 + $0x18] sm:$0xff]
        %v356 = vld [vmem:[#allocation7 + $0x20] sm:$0xff]
        %v357 = vld [vmem:[#allocation7 + $0x28] sm:$0xff]
        %v358 = vld [vmem:[#allocation7 + $0x30] sm:$0xff]
        %v359 = vld [vmem:[#allocation7 + $0x38] sm:$0xff]
        %v360 = vld [vmem:[#allocation7 + $0x40] sm:$0xff]
        %v361 = vld [vmem:[#allocation7 + $0x48] sm:$0xff]
        %v362 = vld [vmem:[#allocation7 + $0x50] sm:$0xff]
        %v363 = vld [vmem:[#allocation7 + $0x58] sm:$0xff]
        %v364 = vld [vmem:[#allocation7 + $0x60] sm:$0xff]
        %v365 = vld [vmem:[#allocation7 + $0x68] sm:$0xff]
        %v366 = vld [vmem:[#allocation7 + $0x70] sm:$0xff]
        %v367 = vld [vmem:[#allocation7 + $0x78] sm:$0xff]
        %v368 = vld [vmem:[%s4] sm:$0x1]
        %v370 = vperm.slane %v368, 0
        %372 = vmatpush.msra.mxu0 %v367
        %373 = vmatpush.msra.mxu0 %v366
        %374 = vmatpush.msra.mxu0 %v365
        %375 = vmatpush.msra.mxu0 %v364
        %376 = vmatpush.msra.mxu0 %v363
        %377 = vmatpush.msra.mxu0 %v362
        %378 = vmatpush.msra.mxu0 %v361
        %379 = vmatpush.msra.mxu0 %v360
        %380 = vmatpush.msra.mxu0 %v359
        %381 = vmatpush.msra.mxu0 %v358
        %382 = vmatpush.msra.mxu0 %v357
        %383 = vmatpush.msra.mxu0 %v356
        %384 = vmatpush.msra.mxu0 %v355
        %385 = vmatpush.msra.mxu0 %v354
        %386 = vmatpush.msra.mxu0 %v353
        %387 = vmatpush.msra.mxu0 %v352
        %388 = vmatmul.f32.gmra.mxu0 %v351
        %v389 = vpop.f32.mrf.mxu0
        %v390 = vadd.f32 %v370, %v389
        %391 = vdwg.mxu0
        %392 = vst [vmem:[%s274] sm:$0xff] %v390
        %s393 = sand.u32 %s141, 1
        %s394 = scalar_lea.sflag [#allocation4], %s393
        %s395 = sand.u32 %s141, 1
        %s396 = smul.addr %s395, 8
        %s397 = scalar_lea.vmem [#allocation8], %s396
        // Predicated region
        $region53: #{tpu_custom_call.1} parent=39 // pred_check
          %p398 = pneg %p151
        $region54: #{tpu_custom_call.1} parent=39 // pred_check_branch
          %400 = sbr.rel (%p398) target = $region56
        $region55: #{tpu_custom_call.1} parent=39 // pred_region
          %402 = vsyncadd %s394, 0
          %s403 = smul.addr %s23, 8
          %s404 = scalar_lea.hbm %s5, %s403
          %s406 = sshll.u32 %s397, 4
          %s407 = int_to_ptr.vmem [resolvable:$true] %s406
          %s408 = sshll.u32 %s404, 4
          %s409 = int_to_ptr.hbm [resolvable:$true] %s408
          %411 = dma.vmem_to_hbm [thread:$0]  %s407, 128, %s409, %s394
        $region56: #{tpu_custom_call.1} parent=39 // pred_fallthru
          _
      $region40: #{tpu_custom_call.1} parent=5 // pred_fallthru
        _
      %p412 = scmp.le.s32.totalorder 2, %s18
      // Predicated region
      $region57: #{tpu_custom_call.1} parent=5 // pred_check
        %p413 = pneg %p412
      $region58: #{tpu_custom_call.1} parent=5 // pred_check_branch
        %415 = sbr.rel (%p413) target = $region60
      $region59: #{tpu_custom_call.1} parent=5 // pred_region
        %s416 = ssub.s32 %s18, 2
        // Predicated region
        $region61: #{tpu_custom_call.1} parent=59 // pred_check
          %p417 = pneg %p157
        $region62: #{tpu_custom_call.1} parent=59 // pred_check_branch
          %419 = sbr.rel (%p417) target = $region64
        $region63: #{tpu_custom_call.1} parent=59 // pred_region
          %s420 = sand.u32 %s142, 1
          %s421 = scalar_lea.sflag [#allocation4], %s420
          %s422 = sand.u32 %s142, 1
          %s423 = smul.addr %s422, 8
          %s424 = scalar_lea.vmem [#allocation8], %s423
          %426 = dma.done %s421, 128
        $region64: #{tpu_custom_call.1} parent=59 // pred_fallthru
          _
      $region60: #{tpu_custom_call.1} parent=5 // pred_fallthru
        _
    $region6: #{tpu_custom_call.1} parent=1 // loop_footer
      %s22 = sadd.s32 1, %s18
    $region7: #{tpu_custom_call.1} parent=1 // loop_footer_branch
      %17 = sbr.rel target = $region3
    $region8: #{tpu_custom_call.1} parent=1 // loop_exit
      _
    %427 = vsyncpa [#allocation3], 1
    %s428 = scalar_lea.sflag [#allocation3], 1
    %429 = vsyncpa %s428, 1
    %430 = vsyncpa [#allocation6], 1
    %431 = vsyncpa [#allocation4], 1
    %s432 = scalar_lea.sflag [#allocation4], 1
    %433 = vsyncpa %s432, 1

</llo_original>
